<compile_context>
chip_gen: v7x
topology: tpu7x:2x2x1
jax: 0.10.0
libtpu: 0.0.40
codegen_flags: <defaults>
</compile_context>

<pallas_src>
import functools

import jax
import jax.numpy as jnp
from jax.experimental import pallas as pl
from jax.experimental.pallas import tpu as pltpu


def _round_up(x, m):
    return ((x + m - 1) // m) * m


def _cdiv(a, b):
    return (a + b - 1) // b


def _trajectory_kernel(tile_s, p_ref, row_ref, e_ref, x_ref, y_ref):
    """One (B_pad, tile_s) tile of the closed-form trajectory ODE.

    p_ref   : SMEM (1,)             [inv_one_m]
    row_ref : VMEM (B_pad, 6)       per-row [ba1, ba2, c, base+c, k, t0]
    e_ref   : VMEM (B_pad, tile_s)  E[row, j] = exp(k_row * j)  (constant block)
    """
    inv_one_m = p_ref[0]

    ba1 = row_ref[:, 0:1]          # b1 * a1
    ba2 = row_ref[:, 1:2]          # b2 * a2
    c = row_ref[:, 2:3]            # ba2 / ba1
    bc = row_ref[:, 3:4]           # (eta_y*eta_y_ex)**one_m + c
    k = row_ref[:, 4:5]            # one_m * b1 * a1
    t0 = row_ref[:, 5:6]           # 1 + t1 + g * S_row_pad   (folded-row origin)

    off = (pl.program_id(0) * tile_s).astype(jnp.float32)
    # exp(k*t) factorized:  exp(k*(t0+off)) * exp(k*j).  The second factor is
    # the precomputed E table; the first is a tiny (B_pad, 1) EUP call.
    head = bc * jnp.exp(k * (t0 + off))              # (B_pad, 1)

    term1 = head * e_ref[...] - c                    # (B_pad, tile_s)

    # y = term1 ** (1/one_m)   (single log + single exp)
    y = jnp.exp(jnp.log(term1) * inv_one_m)
    # y ** (r*r_ex) == y / term1  exactly (requires term1 > 0, as in the ref).
    y_pow = y / term1

    x_ref[...] = ba1 * y + ba2 * y_pow
    y_ref[...] = y


def trajectory_ode_forward(inp, params, *, seq_len,
                           r_ex=1.0, eta_y_ex=1.0, b1=1.0, b2=1.0,
                           t1=0.001, plus=0.1):
    """inp: [B, 1, 2] float32, params: [2] float32 -> (x [B,1,S], y [B,1,S])."""
    inp = inp.astype(jnp.float32)
    B = int(inp.shape[0])
    S = int(seq_len)

    # ---- per-call scalars (folded once, outside the kernel) ----------------
    r = jnp.asarray(params[0], jnp.float32)
    eta_y = jnp.asarray(params[1], jnp.float32) + jnp.asarray(plus, jnp.float32)
    one_m = 1.0 - r * jnp.asarray(r_ex, jnp.float32)
    base = (eta_y * jnp.asarray(eta_y_ex, jnp.float32)) ** one_m
    inv_one_m = 1.0 / one_m
    p = jnp.reshape(inv_one_m, (1,)).astype(jnp.float32)

    # ---- per-batch-row quantities (hoisted out of the kernel) --------------
    a1 = inp[:, 0, 0]
    a2 = inp[:, 0, 1]
    ba1 = jnp.asarray(b1, jnp.float32) * a1
    ba2 = jnp.asarray(b2, jnp.float32) * a2
    c = ba2 / ba1
    bc = base + c
    k = one_m * ba1

    # ---- layout: fold time chunks into unused sublanes when B < 8 ----------
    G = max(1, 8 // B)                  # time chunks per batch row
    B_fold = B * G
    B_pad = _round_up(B_fold, 8)

    # Per-folded-row time length, padded only to the 128-lane boundary.
    S_row = _round_up(max(1, _cdiv(S, G)), 128)
    n_128 = S_row // 128
    # Large tiles (amortize the ~0.35us/step overhead) but keep >= 2 grid
    # steps when possible so v7x's two TensorCores both get work; also bound
    # per-block bytes so big batches never stress VMEM.
    target_chunks = min(64, max(1, (512 * 1024) // (B_pad * 128)))
    if n_128 <= 1:
        n_tiles, tile128 = 1, 1
    else:
        n_tiles = max(2, _cdiv(n_128, target_chunks))
        tile128 = _cdiv(n_128, n_tiles)
        n_tiles = _cdiv(n_128, tile128)
    tile_s = tile128 * 128
    S_row_pad = n_tiles * tile_s        # >= ceil(S/G); waste < n_tiles*128 lanes

    # Folded row (b, g) -> internal row b*G + g, carrying global time indices
    # [g*S_row_pad, (g+1)*S_row_pad);  t = 1 + t1 + global_index.
    t0 = (1.0 + jnp.asarray(t1, jnp.float32)
          + jnp.arange(G, dtype=jnp.float32) * float(S_row_pad))

    def fold(v):  # (B,) -> (B_fold,),  row b*G+g gets v[b]
        return jnp.repeat(v, G, total_repeat_length=B_fold)

    rows = jnp.stack([fold(ba1), fold(ba2), fold(c), fold(bc), fold(k),
                      jnp.tile(t0, B)], axis=1)            # (B_fold, 6)
    rows = jnp.pad(rows, ((0, B_pad - B_fold), (0, 0)))     # pad rows: k = 0

    # E table shared by every grid step: E[row, j] = exp(k_row * j).
    e_tab = jnp.exp(rows[:, 4:5] * jnp.arange(tile_s, dtype=jnp.float32)[None, :])

    kernel = functools.partial(_trajectory_kernel, tile_s)
    x_pad, y_pad = pl.pallas_call(
        kernel,
        out_shape=(
            jax.ShapeDtypeStruct((B_pad, S_row_pad), jnp.float32),
            jax.ShapeDtypeStruct((B_pad, S_row_pad), jnp.float32),
        ),
        grid=(n_tiles,),
        in_specs=[
            pl.BlockSpec(memory_space=pltpu.MemorySpace.SMEM),      # scalars
            pl.BlockSpec((B_pad, 6), lambda i: (0, 0)),             # per-row data
            pl.BlockSpec((B_pad, tile_s), lambda i: (0, 0)),        # E table
        ],
        out_specs=(
            pl.BlockSpec((B_pad, tile_s), lambda i: (0, i)),
            pl.BlockSpec((B_pad, tile_s), lambda i: (0, i)),
        ),
        compiler_params=pltpu.CompilerParams(
            dimension_semantics=("parallel",)),
    )(p, rows, e_tab)

    # Un-fold: (B*G, S_row_pad) -> (B, G*S_row_pad), slice valid time, add
    # the PyTorch .unsqueeze(1) axis.
    x = x_pad[:B_fold].reshape(B, G * S_row_pad)[:, :S][:, None, :]
    y = y_pad[:B_fold].reshape(B, G * S_row_pad)[:, :S][:, None, :]
    return x, y


def _reference(inp, params, *, seq_len, r_ex=1.0, eta_y_ex=1.0, b1=1.0,
               b2=1.0, t1=0.001, plus=0.1):
    inp = inp.astype(jnp.float32)
    r = params[0]
    eta_y = params[1] + plus
    a1 = inp[:, :, 0]
    a2 = inp[:, :, 1]
    t = jnp.arange(1, seq_len + 1, dtype=jnp.float32) + t1
    one_m = 1.0 - r * r_ex
    c = a2 * b2 / (a1 * b1)
    term1 = ((eta_y * eta_y_ex) ** one_m + c) * jnp.exp(b1 * a1 * one_m * t) - c
    y = term1 ** (1.0 / one_m)
    x = b1 * a1 * y + b2 * a2 * y ** (r * r_ex)
    return x[:, None, :], y[:, None, :]


if __name__ == "__main__":
    key = jax.random.PRNGKey(0)
    k1, k2 = jax.random.split(key)
    params = jnp.array([0.5, 1.0], dtype=jnp.float32)   # [r, eta_y]

    # --- case 1: module-sized shapes (batch=2, seq_len=8) -------------------
    seq_len = 8
    batch = 2
    # a1, a2 kept positive so fractional powers / logs are well-defined
    # (same domain the PyTorch module implicitly assumes).
    inp = jax.random.uniform(k1, (batch, 1, 2), dtype=jnp.float32,
                             minval=0.5, maxval=1.5)
    x, y = trajectory_ode_forward(inp, params, seq_len=seq_len)
    jax.block_until_ready((x, y))
    x_ref, y_ref = _reference(inp, params, seq_len=seq_len)
    assert x.shape == (batch, 1, seq_len) and y.shape == (batch, 1, seq_len)
    assert jnp.allclose(x, x_ref, rtol=1e-4, atol=1e-4), "x mismatch vs reference"
    assert jnp.allclose(y, y_ref, rtol=1e-4, atol=1e-4), "y mismatch vs reference"

    # --- case 2: exercises sublane folding (G=2), row/lane padding and a
    #             multi-step grid; small a keeps exp() in range for the ref. --
    seq_len2 = 300
    batch2 = 3
    inp2 = jax.random.uniform(k2, (batch2, 1, 2), dtype=jnp.float32,
                              minval=0.01, maxval=0.05)
    x2, y2 = trajectory_ode_forward(inp2, params, seq_len=seq_len2)
    jax.block_until_ready((x2, y2))
    x2_ref, y2_ref = _reference(inp2, params, seq_len=seq_len2)
    assert x2.shape == (batch2, 1, seq_len2) and y2.shape == (batch2, 1, seq_len2)
    assert jnp.allclose(x2, x2_ref, rtol=1e-4, atol=1e-4), "x mismatch (case 2)"
    assert jnp.allclose(y2, y2_ref, rtol=1e-4, atol=1e-4), "y mismatch (case 2)"

    print("KERNEL_OK")
</pallas_src>

<mosaic_0001>
module attributes {stable_mosaic.version = 11 : i64} {
  func.func @_trajectory_kernel(%arg0: i32, %arg1: memref<1xf32, #tpu.memory_space<smem>>, %arg2: memref<8x6xf32, #tpu.memory_space<vmem>>, %arg3: memref<8x128xf32, #tpu.memory_space<vmem>>, %arg4: memref<8x128xf32, #tpu.memory_space<vmem>>, %arg5: memref<8x128xf32, #tpu.memory_space<vmem>>) attributes {dimension_semantics = [#tpu.dimension_semantics<parallel>], iteration_bounds = array<i64: 1>, scalar_prefetch = 0 : i64, scratch_operands = 0 : i64, tpu.core_type = #tpu.core_type<tc>, window_params = [{transform_indices = @transform_0, window_bounds = array<i64: 1>}, {pipeline_mode = #tpu.pipeline_mode<synchronous>, transform_indices = @transform_1, window_bounds = array<i64: 8, 6>}, {pipeline_mode = #tpu.pipeline_mode<synchronous>, transform_indices = @transform_2, window_bounds = array<i64: 8, 128>}, {transform_indices = @transform_3, window_bounds = array<i64: 8, 128>}, {transform_indices = @transform_4, window_bounds = array<i64: 8, 128>}]} {
    %c0 = arith.constant 0 : index
    %0 = memref.load %arg1[%c0] : memref<1xf32, #tpu.memory_space<smem>>
    %c0_0 = arith.constant 0 : index
    %c0_1 = arith.constant 0 : index
    %1 = vector.load %arg2[%c0_0, %c0_1] : memref<8x6xf32, #tpu.memory_space<vmem>>, vector<8x1xf32>
    %c0_2 = arith.constant 0 : index
    %c1 = arith.constant 1 : index
    %2 = vector.load %arg2[%c0_2, %c1] : memref<8x6xf32, #tpu.memory_space<vmem>>, vector<8x1xf32>
    %c0_3 = arith.constant 0 : index
    %c2 = arith.constant 2 : index
    %3 = vector.load %arg2[%c0_3, %c2] : memref<8x6xf32, #tpu.memory_space<vmem>>, vector<8x1xf32>
    %c0_4 = arith.constant 0 : index
    %c3 = arith.constant 3 : index
    %4 = vector.load %arg2[%c0_4, %c3] : memref<8x6xf32, #tpu.memory_space<vmem>>, vector<8x1xf32>
    %c0_5 = arith.constant 0 : index
    %c4 = arith.constant 4 : index
    %5 = vector.load %arg2[%c0_5, %c4] : memref<8x6xf32, #tpu.memory_space<vmem>>, vector<8x1xf32>
    %c0_6 = arith.constant 0 : index
    %c5 = arith.constant 5 : index
    %6 = vector.load %arg2[%c0_6, %c5] : memref<8x6xf32, #tpu.memory_space<vmem>>, vector<8x1xf32>
    %c128_i32 = arith.constant 128 : i32
    %7 = arith.muli %arg0, %c128_i32 : i32
    %8 = arith.sitofp %7 : i32 to f32
    %9 = vector.broadcast %8 : f32 to vector<8x1xf32>
    %10 = arith.addf %6, %9 : vector<8x1xf32>
    %11 = arith.mulf %5, %10 : vector<8x1xf32>
    %12 = math.exp %11 : vector<8x1xf32>
    %13 = arith.mulf %4, %12 : vector<8x1xf32>
    %c0_7 = arith.constant 0 : index
    %c0_8 = arith.constant 0 : index
    %14 = vector.load %arg3[%c0_7, %c0_8] : memref<8x128xf32, #tpu.memory_space<vmem>>, vector<8x128xf32>
    %15 = vector.broadcast %13 : vector<8x1xf32> to vector<8x128xf32>
    %16 = arith.mulf %15, %14 : vector<8x128xf32>
    %17 = vector.broadcast %3 : vector<8x1xf32> to vector<8x128xf32>
    %18 = arith.subf %16, %17 : vector<8x128xf32>
    %19 = math.log %18 : vector<8x128xf32>
    %20 = vector.broadcast %0 : f32 to vector<8x128xf32>
    %21 = arith.mulf %19, %20 : vector<8x128xf32>
    %22 = math.exp %21 : vector<8x128xf32>
    %23 = arith.divf %22, %18 : vector<8x128xf32>
    %24 = vector.broadcast %1 : vector<8x1xf32> to vector<8x128xf32>
    %25 = arith.mulf %24, %22 : vector<8x128xf32>
    %26 = vector.broadcast %2 : vector<8x1xf32> to vector<8x128xf32>
    %27 = arith.mulf %26, %23 : vector<8x128xf32>
    %28 = arith.addf %25, %27 : vector<8x128xf32>
    %c0_9 = arith.constant 0 : index
    %c0_10 = arith.constant 0 : index
    %29 = vector.load %arg4[%c0_9, %c0_10] : memref<8x128xf32, #tpu.memory_space<vmem>>, vector<8x128xf32>
    tpu.vector_store %arg4[%c0_9, %c0_10], %28 {strides = array<i32>} : memref<8x128xf32, #tpu.memory_space<vmem>>, vector<8x128xf32>,
    %c0_11 = arith.constant 0 : index
    %c0_12 = arith.constant 0 : index
    %30 = vector.load %arg5[%c0_11, %c0_12] : memref<8x128xf32, #tpu.memory_space<vmem>>, vector<8x128xf32>
    tpu.vector_store %arg5[%c0_11, %c0_12], %22 {strides = array<i32>} : memref<8x128xf32, #tpu.memory_space<vmem>>, vector<8x128xf32>,
    return
  }
  func.func @transform_0(%arg0: i32) -> i32 {
    %c0_i32 = arith.constant 0 : i32
    %c0_i32_0 = arith.constant 0 : i32
    return %c0_i32 : i32
  }
  func.func @transform_1(%arg0: i32) -> (i32, i32) {
    %c0_i32 = arith.constant 0 : i32
    %c0_i32_0 = arith.constant 0 : i32
    %c0_i32_1 = arith.constant 0 : i32
    return %c0_i32, %c0_i32_0 : i32, i32
  }
  func.func @transform_2(%arg0: i32) -> (i32, i32) {
    %c0_i32 = arith.constant 0 : i32
    %c0_i32_0 = arith.constant 0 : i32
    %c0_i32_1 = arith.constant 0 : i32
    return %c0_i32, %c0_i32_0 : i32, i32
  }
  func.func @transform_3(%arg0: i32) -> (i32, i32) {
    %c0_i32 = arith.constant 0 : i32
    %c0_i32_0 = arith.constant 0 : i32
    return %c0_i32, %arg0 : i32, i32
  }
  func.func @transform_4(%arg0: i32) -> (i32, i32) {
    %c0_i32 = arith.constant 0 : i32
    %c0_i32_0 = arith.constant 0 : i32
    return %c0_i32, %arg0 : i32, i32
  }
}

</mosaic_0001>

<llo_original>
// kernel: tpu_custom_call.1
$region0: #{tpu_custom_call.1}
  #allocation0 [shape = 'u32[]', space=smem, size = 0x4, offset = 0x4, fixed_abs, tag = 'smem constant byte address 0x4 - core index']
  #allocation1 [shape = 'u32[144,128]{1,0:T(1,128)}', space=vmem, size = 0x12000, scoped, tag = 'internal scratch']
  #allocation2 [shape = 'f32[1]{0:T(128)S(6)}', space=smem, size = 0x200, scoped, tag = 'scoped memory for tpu_custom_call.1']
  %s0 = inlined_call_operand.<no memory space> [shape: f32[1], index: 0, kind: input, shape index: {}]
  %s1 = inlined_call_operand.hbm [shape: f32[8,6], index: 1, kind: input, shape index: {}]
  %s2 = inlined_call_operand.hbm [shape: f32[8,128], index: 2, kind: input, shape index: {}]
  %s3 = inlined_call_operand.hbm [shape: f32[8,128], index: 3, kind: output, shape index: {0}]
  %s4 = inlined_call_operand.hbm [shape: f32[8,128], index: 4, kind: output, shape index: {1}]
  %5 = xla_tuple %s3, %s4
  %s6 = sld [smem:[#allocation0]]
  $region38: #{tpu_custom_call.1} parent=0
    _
  %s8 = ssub.s32 1, %s6
  %s9 = scalar_select 0, %s8, %s6
  %10 = sst [smem:[#allocation2]] %s0
  $region1: #{tpu_custom_call.1} parent=0
    #allocation3 [shape = 'u8[4096]{0}', space=vmem, size = 0x1000, scoped, tag = 'input window, operand 1, single buffered']
    #allocation4 [shape = 's32[1]{0}', space=sflag, size = 0x4, scoped, tag = 'scoped memory for tpu_custom_call.1']
    #allocation5 [shape = 's32[1]{0}', space=sflag, size = 0x4, scoped, tag = 'scoped memory for tpu_custom_call.1']
    #allocation6 [shape = 'u8[4096]{0}', space=vmem, size = 0x1000, scoped, tag = 'input window, operand 2, single buffered']
    #allocation7 [shape = 's32[1]{0}', space=sflag, size = 0x4, scoped, tag = 'scoped memory for tpu_custom_call.1']
    #allocation8 [shape = 'u8[4096]{0}', space=vmem, size = 0x1000, scoped, tag = 'output window, operand 0, single buffered']
    #allocation9 [shape = 'u8[4096]{0}', space=vmem, size = 0x1000, scoped, tag = 'output window, operand 1, single buffered']
    #allocation10 [shape = 's32[1]{0}', space=sflag, size = 0x4, scoped, tag = 'scoped memory for tpu_custom_call.1']
    %11 = vsyncpa [#allocation4], 0
    %12 = vsyncpa [#allocation7], 0
    %13 = vsyncpa [#allocation5], 0
    %14 = vsyncpa [#allocation10], 0
    // Predicated region
    $region2: #{tpu_custom_call.1} parent=1 // pred_check
      _
    $region3: #{tpu_custom_call.1} parent=1 // pred_check_branch
      %16 = sbr.rel (0) target = $region5
    $region4: #{tpu_custom_call.1} parent=1 // pred_region
      _
    $region5: #{tpu_custom_call.1} parent=1 // pred_fallthru
      _
    // Predicated region
    $region6: #{tpu_custom_call.1} parent=1 // pred_check
      _
    $region7: #{tpu_custom_call.1} parent=1 // pred_check_branch
      %18 = sbr.rel (0) target = $region9
    $region8: #{tpu_custom_call.1} parent=1 // pred_region
      %s20 = ssub.s32 128, 128
      %21 = vsyncadd [#allocation4], %s20
      %s23 = sshll.u32 [#allocation3], 4
      %s24 = int_to_ptr.vmem [resolvable:$true] %s23
      %26 = dma.hbm_to_vmem [thread:$0]  %s1, 128, %s24, [#allocation4]
    $region9: #{tpu_custom_call.1} parent=1 // pred_fallthru
      _
    // Predicated region
    $region10: #{tpu_custom_call.1} parent=1 // pred_check
      _
    $region11: #{tpu_custom_call.1} parent=1 // pred_check_branch
      %28 = sbr.rel (0) target = $region13
    $region12: #{tpu_custom_call.1} parent=1 // pred_region
      %s30 = ssub.s32 128, 128
      %31 = vsyncadd [#allocation7], %s30
      %s33 = sshll.u32 [#allocation6], 4
      %s34 = int_to_ptr.vmem [resolvable:$true] %s33
      %36 = dma.hbm_to_vmem [thread:$0]  %s2, 128, %s34, [#allocation7]
    $region13: #{tpu_custom_call.1} parent=1 // pred_fallthru
      _
    // Predicated region
    $region14: #{tpu_custom_call.1} parent=1 // pred_check
      _
    $region15: #{tpu_custom_call.1} parent=1 // pred_check_branch
      %38 = sbr.rel (0) target = $region17
    $region16: #{tpu_custom_call.1} parent=1 // pred_region
      %39 = dma.done [#allocation4], 128
    $region17: #{tpu_custom_call.1} parent=1 // pred_fallthru
      _
    // Predicated region
    $region18: #{tpu_custom_call.1} parent=1 // pred_check
      _
    $region19: #{tpu_custom_call.1} parent=1 // pred_check_branch
      %41 = sbr.rel (0) target = $region21
    $region20: #{tpu_custom_call.1} parent=1 // pred_region
      %42 = dma.done [#allocation7], 128
    $region21: #{tpu_custom_call.1} parent=1 // pred_fallthru
      _
    %s43 = sld [smem:[#allocation2]]
    %v44 = vld [vmem:[#allocation3] sm:$0xff]
    %s45 = smul.u32 0, 128
    %s46 = scvt.s32.f32 %s45
    %v47 = vstv %s46
    %v48 = vadd.f32 %v44, %v47
    %50 = vrot.lane.b32.xlu0 %v48, 127
    %v51 = vpop.permute.xlu0 %50
    %v53 = vmul.f32 %v44, %v51
    %v54 = vmul.f32 %v53, 1.442695
    %v55 = vpow.pop %v54
    %57 = vrot.lane.b32.xlu0 %v55, 127
    %v58 = vpop.permute.xlu0 %57
    %v60 = vmul.f32 %v44, %v58
    %v61 = vld [vmem:[#allocation6] sm:$0xff]
    %63 = vset.pattern.permute.xlu0 3
    %64 = vperm.xlu0 %63, %v60
    %v65 = vpop.permute.xlu0 %64
    %v67 = vmul.f32 %v65, %v61
    %69 = vset.pattern.permute.xlu0 2
    %70 = vperm.xlu0 %69, %v44
    %v71 = vpop.permute.xlu0 %70
    %v73 = vsub.f32 %v67, %v71
    %v74 = vlog2.pop %v73
    %v75 = vmul.f32 %v74, 0.6931472
    %v76 = vstv %s43
    %v77 = vmul.f32 %v75, %v76
    %v78 = vmul.f32 %v77, 1.442695
    %v79 = vpow.pop %v78
    %v80 = vrcp.pop %v73
    %v81 = vmul.f32 %v79, %v80
    %82 = vset.pattern.permute.xlu0 0
    %83 = vperm.xlu0 %82, %v44
    %v84 = vpop.permute.xlu0 %83
    %v86 = vmul.f32 %v84, %v79
    %87 = vset.pattern.permute.xlu0 1
    %88 = vperm.xlu0 %87, %v44
    %v89 = vpop.permute.xlu0 %88
    %v91 = vmul.f32 %v89, %v81
    %v92 = vadd.f32 %v86, %v91
    %93 = vst [vmem:[#allocation8] sm:$0xff] %v92
    %94 = vst [vmem:[#allocation9] sm:$0xff] %v79
    // Predicated region
    $region22: #{tpu_custom_call.1} parent=1 // pred_check
      _
    $region23: #{tpu_custom_call.1} parent=1 // pred_check_branch
      %96 = sbr.rel (0) target = $region25
    $region24: #{tpu_custom_call.1} parent=1 // pred_region
      %s98 = ssub.s32 128, 128
      %99 = vsyncadd [#allocation5], %s98
      %s101 = sshll.u32 [#allocation8], 4
      %s102 = int_to_ptr.vmem [resolvable:$true] %s101
      %104 = dma.vmem_to_hbm [thread:$0]  %s102, 128, %s3, [#allocation5]
    $region25: #{tpu_custom_call.1} parent=1 // pred_fallthru
      _
    // Predicated region
    $region26: #{tpu_custom_call.1} parent=1 // pred_check
      _
    $region27: #{tpu_custom_call.1} parent=1 // pred_check_branch
      %106 = sbr.rel (0) target = $region29
    $region28: #{tpu_custom_call.1} parent=1 // pred_region
      %s108 = ssub.s32 128, 128
      %109 = vsyncadd [#allocation10], %s108
      %s111 = sshll.u32 [#allocation9], 4
      %s112 = int_to_ptr.vmem [resolvable:$true] %s111
      %114 = dma.vmem_to_hbm [thread:$0]  %s112, 128, %s4, [#allocation10]
    $region29: #{tpu_custom_call.1} parent=1 // pred_fallthru
      _
    // Predicated region
    $region30: #{tpu_custom_call.1} parent=1 // pred_check
      _
    $region31: #{tpu_custom_call.1} parent=1 // pred_check_branch
      %116 = sbr.rel (0) target = $region33
    $region32: #{tpu_custom_call.1} parent=1 // pred_region
      %117 = dma.done [#allocation5], 128
    $region33: #{tpu_custom_call.1} parent=1 // pred_fallthru
      _
    // Predicated region
    $region34: #{tpu_custom_call.1} parent=1 // pred_check
      _
    $region35: #{tpu_custom_call.1} parent=1 // pred_check_branch
      %119 = sbr.rel (0) target = $region37
    $region36: #{tpu_custom_call.1} parent=1 // pred_region
      %120 = dma.done [#allocation10], 128
    $region37: #{tpu_custom_call.1} parent=1 // pred_fallthru
      _
    %121 = vsyncpa [#allocation4], 1
    %122 = vsyncpa [#allocation7], 1
    %123 = vsyncpa [#allocation5], 1
    %124 = vsyncpa [#allocation10], 1

</llo_original>
